<compile_context>
chip_gen: v6e
topology: v6e:2x2x1
jax: 0.10.0
libtpu: 0.0.40
codegen_flags: <defaults>
</compile_context>

<pallas_src>
import jax
import jax.numpy as jnp
from jax.experimental import pallas as pl
from jax.experimental.pallas import tpu as pltpu

# ----- module-defined layer sizes and their lane-dense padded versions -----
H1, H2, H3 = 400, 100, 2
H1P, H2P, H3P = 512, 128, 128
V_TH = 1.0                       # ParametricLIFNode default v_threshold


def _round_up(a: int, m: int) -> int:
    return (a + m - 1) // m * m


def snn_kernel(thr_ref, x_ref, w1_ref, w2_ref, w3_ref, out_ref, acc1_ref):
    """Grid = (batch tiles, K tiles over D_IN).

    thr_ref  : SMEM (3,) f32   thresholds V_TH / sigmoid(w) per PLIF layer (scalar prefetch)
    x_ref    : VMEM (TM, TK)   bf16 flattened-input tile
    w1_ref   : VMEM (TK, H1P)  bf16 W1^T tile (streamed over K)
    w2_ref   : VMEM (H1P, H2P) bf16 W2^T (resident)
    w3_ref   : VMEM (H2P, H3P) bf16 W3^T (resident)
    out_ref  : VMEM (TM, H3P)  f32 spikes (written at last K step only)
    acc1_ref : VMEM (TM, H1P)  f32 layer-1 accumulator scratch
    """
    k = pl.program_id(1)

    @pl.when(k == 0)
    def _():
        acc1_ref[...] = jnp.zeros_like(acc1_ref)

    # Layer 1 partial product, accumulated in f32 over the K tiles.
    acc1_ref[...] += jnp.dot(x_ref[...], w1_ref[...],
                             preferred_element_type=jnp.float32)

    @pl.when(k == pl.num_programs(1) - 1)
    def _():
        # PLIF fire with decay folded into the threshold (Dropout = identity in eval mode).
        # Spikes are exactly 0/1 -> bf16 cast is lossless for the next MXU matmul.
        s1 = (acc1_ref[...] >= thr_ref[0]).astype(jnp.bfloat16)
        h2 = jnp.dot(s1, w2_ref[...], preferred_element_type=jnp.float32)
        s2 = (h2 >= thr_ref[1]).astype(jnp.bfloat16)
        h3 = jnp.dot(s2, w3_ref[...], preferred_element_type=jnp.float32)
        out_ref[...] = (h3 >= thr_ref[2]).astype(jnp.float32)


def snn_forward(x_nchw, w1_t, w2_t, w3_t, plif_w, *, tk=2048):
    """x_nchw: [N, C, H, W] f32.  w*_t are the PyTorch weights pre-transposed ([in, out]).
    plif_w: (3,) PLIF raw parameters.  Returns [N, 2] f32 spikes."""
    n = x_nchw.shape[0]
    x_flat = x_nchw.reshape(n, -1)            # layer.Flatten (row-major, same as PyTorch)
    d_in = x_flat.shape[1]

    # ---- M (batch) tiling: pad to a bf16-friendly sublane multiple, tile at 128 rows. ----
    tm = 128 if n >= 128 else _round_up(n, 16)
    n_pad = _round_up(n, tm)

    # ---- K tiling over D_IN so W1 is streamed (fits v5e/v6e/v7x VMEM at the real size). ----
    tk = min(_round_up(tk, 256), _round_up(d_in, 256))
    d_pad = _round_up(d_in, tk)

    # Pad + cast input; padded rows/cols are zero so they contribute nothing.
    x_p = jnp.zeros((n_pad, d_pad), jnp.bfloat16)
    x_p = x_p.at[:n, :d_in].set(x_flat.astype(jnp.bfloat16))

    # Pad weights to lane-dense shapes; padded rows/cols are zero (correctness-preserving).
    w1_p = jnp.zeros((d_pad, H1P), jnp.bfloat16).at[:d_in, :H1].set(w1_t.astype(jnp.bfloat16))
    w2_p = jnp.zeros((H1P, H2P), jnp.bfloat16).at[:H1, :H2].set(w2_t.astype(jnp.bfloat16))
    w3_p = jnp.zeros((H2P, H3P), jnp.bfloat16).at[:H2, :H3].set(w3_t.astype(jnp.bfloat16))

    # Fold PLIF decay into thresholds: (h * sigmoid(w) >= V_TH) <=> (h >= V_TH / sigmoid(w)).
    thr = (V_TH / jax.nn.sigmoid(plif_w)).astype(jnp.float32)

    nb = n_pad // tm
    nk = d_pad // tk

    out_p = pl.pallas_call(
        snn_kernel,
        out_shape=jax.ShapeDtypeStruct((n_pad, H3P), jnp.float32),
        grid_spec=pltpu.PrefetchScalarGridSpec(
            num_scalar_prefetch=1,                      # thr -> SMEM
            grid=(nb, nk),
            in_specs=[
                pl.BlockSpec((tm, tk), lambda i, k, thr: (i, k)),     # x tile
                pl.BlockSpec((tk, H1P), lambda i, k, thr: (k, 0)),    # W1^T tile (streamed)
                pl.BlockSpec((H1P, H2P), lambda i, k, thr: (0, 0)),   # W2^T (resident)
                pl.BlockSpec((H2P, H3P), lambda i, k, thr: (0, 0)),   # W3^T (resident)
            ],
            out_specs=pl.BlockSpec((tm, H3P), lambda i, k, thr: (i, 0)),
            scratch_shapes=[pltpu.VMEM((tm, H1P), jnp.float32)],      # layer-1 accumulator
        ),
        compiler_params=pltpu.CompilerParams(
            dimension_semantics=("parallel", "arbitrary"),
        ),
    )(thr, x_p, w1_p, w2_p, w3_p)

    return out_p[:n, :H3]


def snn_reference(x_nchw, w1_t, w2_t, w3_t, plif_w):
    """Pure-JAX reference with identical numerics (bf16 operands, f32 accumulation,
    folded thresholds — mathematically identical to h*sigmoid(w) >= V_TH since sigmoid>0)."""
    n = x_nchw.shape[0]
    x = x_nchw.reshape(n, -1).astype(jnp.bfloat16)
    thr = V_TH / jax.nn.sigmoid(plif_w)
    h1 = jnp.dot(x, w1_t.astype(jnp.bfloat16), preferred_element_type=jnp.float32)
    s1 = (h1 >= thr[0]).astype(jnp.bfloat16)
    h2 = jnp.dot(s1, w2_t.astype(jnp.bfloat16), preferred_element_type=jnp.float32)
    s2 = (h2 >= thr[1]).astype(jnp.bfloat16)
    h3 = jnp.dot(s2, w3_t.astype(jnp.bfloat16), preferred_element_type=jnp.float32)
    return (h3 >= thr[2]).astype(jnp.float32)


def _init_linear_T(key, fan_in, fan_out):
    """PyTorch nn.Linear-style uniform init, already transposed to [in, out]."""
    bound = 1.0 / jnp.sqrt(jnp.float32(fan_in))
    return jax.random.uniform(key, (fan_in, fan_out), jnp.float32, -bound, bound)


if __name__ == "__main__":
    # Small shapes consistent with the module structure (module uses 1 x 150 x 400 images).
    N, C, H, W = 2, 1, 16, 32            # D_IN = 512 -> exercises 2 K-tiles with tk=256
    D_IN = C * H * W

    key = jax.random.PRNGKey(0)
    kx, k1, k2, k3 = jax.random.split(key, 4)

    x = jax.random.uniform(kx, (N, C, H, W), jnp.float32, 0.0, 4.0)
    w1_t = _init_linear_T(k1, D_IN, H1)  # Linear(D_IN, 400, bias=False).weight.T
    w2_t = _init_linear_T(k2, H1, H2)    # Linear(400, 100, bias=False).weight.T
    w3_t = _init_linear_T(k3, H2, H3)    # Linear(100, 2,   bias=False).weight.T

    # ParametricLIFNode: w init = -log(init_tau - 1), init_tau=2.0 -> w = 0 -> sigmoid(w)=0.5.
    plif_w = jnp.zeros((3,), jnp.float32)

    out = snn_forward(x, w1_t, w2_t, w3_t, plif_w, tk=256)
    out = jax.block_until_ready(out)

    assert out.shape == (N, H3) and out.dtype == jnp.float32
    assert bool(jnp.all((out == 0.0) | (out == 1.0)))

    ref = jax.block_until_ready(snn_reference(x, w1_t, w2_t, w3_t, plif_w))
    assert int(jnp.sum(out != ref)) == 0

    print("KERNEL_OK")
</pallas_src>

<mosaic_0001>
module attributes {stable_mosaic.version = 11 : i64} {
  func.func @snn_kernel(%arg0: i32, %arg1: i32, %arg2: memref<3xf32, #tpu.memory_space<smem>>, %arg3: memref<16x256xbf16, #tpu.memory_space<vmem>>, %arg4: memref<256x512xbf16, #tpu.memory_space<vmem>>, %arg5: memref<512x128xbf16, #tpu.memory_space<vmem>>, %arg6: memref<128x128xbf16, #tpu.memory_space<vmem>>, %arg7: memref<16x128xf32, #tpu.memory_space<vmem>>, %arg8: memref<16x512xf32, #tpu.memory_space<vmem>>) attributes {dimension_semantics = [#tpu.dimension_semantics<parallel>, #tpu.dimension_semantics<arbitrary>], iteration_bounds = array<i64: 1, 2>, scalar_prefetch = 1 : i64, scratch_operands = 1 : i64, tpu.core_type = #tpu.core_type<tc>, window_params = [{transform_indices = @transform_0, window_bounds = array<i64: 16, 256>}, {transform_indices = @transform_1, window_bounds = array<i64: 256, 512>}, {pipeline_mode = #tpu.pipeline_mode<synchronous>, transform_indices = @transform_2, window_bounds = array<i64: 512, 128>}, {pipeline_mode = #tpu.pipeline_mode<synchronous>, transform_indices = @transform_3, window_bounds = array<i64: 128, 128>}, {transform_indices = @transform_4, window_bounds = array<i64: 16, 128>}]} {
    %c0_i32 = arith.constant 0 : i32
    %0 = arith.cmpi eq, %arg1, %c0_i32 : i32
    %1 = arith.extui %0 : i1 to i32
    %c0_i32_0 = arith.constant 0 : i32
    %2 = arith.cmpi ne, %1, %c0_i32_0 : i32
    scf.if %2 {
      %cst_9 = arith.constant 0.000000e+00 : f32
      %12 = vector.broadcast %cst_9 : f32 to vector<16x512xf32>
      %c0_10 = arith.constant 0 : index
      %c0_11 = arith.constant 0 : index
      %13 = vector.load %arg8[%c0_10, %c0_11] : memref<16x512xf32, #tpu.memory_space<vmem>>, vector<16x512xf32>
      tpu.vector_store %arg8[%c0_10, %c0_11], %12 {strides = array<i32>} : memref<16x512xf32, #tpu.memory_space<vmem>>, vector<16x512xf32>,
    } else {
    }
    %c0 = arith.constant 0 : index
    %c0_1 = arith.constant 0 : index
    %3 = vector.load %arg8[%c0, %c0_1] : memref<16x512xf32, #tpu.memory_space<vmem>>, vector<16x512xf32>
    %c0_2 = arith.constant 0 : index
    %c0_3 = arith.constant 0 : index
    %4 = vector.load %arg3[%c0_2, %c0_3] : memref<16x256xbf16, #tpu.memory_space<vmem>>, vector<16x256xbf16>
    %c0_4 = arith.constant 0 : index
    %c0_5 = arith.constant 0 : index
    %5 = vector.load %arg4[%c0_4, %c0_5] : memref<256x512xbf16, #tpu.memory_space<vmem>>, vector<256x512xbf16>
    %cst = arith.constant dense<0.000000e+00> : vector<16x512xf32>
    %6 = tpu.matmul %4, %5, %cst {dimension_numbers = #tpu.dot_dimension_numbers<[1], [0], [0], [1], [0, 0, 1, 1], [], []>} : vector<16x256xbf16>, vector<256x512xbf16>, vector<16x512xf32> -> vector<16x512xf32>
    %7 = arith.addf %3, %6 : vector<16x512xf32>
    %c0_6 = arith.constant 0 : index
    %c0_7 = arith.constant 0 : index
    %8 = vector.load %arg8[%c0_6, %c0_7] : memref<16x512xf32, #tpu.memory_space<vmem>>, vector<16x512xf32>
    tpu.vector_store %arg8[%c0_6, %c0_7], %7 {strides = array<i32>} : memref<16x512xf32, #tpu.memory_space<vmem>>, vector<16x512xf32>,
    %c1_i32 = arith.constant 1 : i32
    %9 = arith.cmpi eq, %arg1, %c1_i32 : i32
    %10 = arith.extui %9 : i1 to i32
    %c0_i32_8 = arith.constant 0 : i32
    %11 = arith.cmpi ne, %10, %c0_i32_8 : i32
    scf.if %11 {
      %c0_9 = arith.constant 0 : index
      %c0_10 = arith.constant 0 : index
      %12 = vector.load %arg8[%c0_9, %c0_10] : memref<16x512xf32, #tpu.memory_space<vmem>>, vector<16x512xf32>
      %c0_11 = arith.constant 0 : index
      %13 = memref.load %arg2[%c0_11] : memref<3xf32, #tpu.memory_space<smem>>
      %14 = vector.broadcast %13 : f32 to vector<16x512xf32>
      %15 = arith.cmpf oge, %12, %14 : vector<16x512xf32>
      %16 = arith.extui %15 : vector<16x512xi1> to vector<16x512xi32>
      %17 = arith.sitofp %16 : vector<16x512xi32> to vector<16x512xf32>
      %18 = arith.truncf %17 : vector<16x512xf32> to vector<16x512xbf16>
      %c0_12 = arith.constant 0 : index
      %c0_13 = arith.constant 0 : index
      %19 = vector.load %arg5[%c0_12, %c0_13] : memref<512x128xbf16, #tpu.memory_space<vmem>>, vector<512x128xbf16>
      %cst_14 = arith.constant dense<0.000000e+00> : vector<16x128xf32>
      %20 = tpu.matmul %18, %19, %cst_14 {dimension_numbers = #tpu.dot_dimension_numbers<[1], [0], [0], [1], [0, 0, 1, 1], [], []>} : vector<16x512xbf16>, vector<512x128xbf16>, vector<16x128xf32> -> vector<16x128xf32>
      %c1 = arith.constant 1 : index
      %21 = memref.load %arg2[%c1] : memref<3xf32, #tpu.memory_space<smem>>
      %22 = vector.broadcast %21 : f32 to vector<16x128xf32>
      %23 = arith.cmpf oge, %20, %22 : vector<16x128xf32>
      %24 = arith.extui %23 : vector<16x128xi1> to vector<16x128xi32>
      %25 = arith.sitofp %24 : vector<16x128xi32> to vector<16x128xf32>
      %26 = arith.truncf %25 : vector<16x128xf32> to vector<16x128xbf16>
      %c0_15 = arith.constant 0 : index
      %c0_16 = arith.constant 0 : index
      %27 = vector.load %arg6[%c0_15, %c0_16] : memref<128x128xbf16, #tpu.memory_space<vmem>>, vector<128x128xbf16>
      %cst_17 = arith.constant dense<0.000000e+00> : vector<16x128xf32>
      %28 = tpu.matmul %26, %27, %cst_17 {dimension_numbers = #tpu.dot_dimension_numbers<[1], [0], [0], [1], [0, 0, 1, 1], [], []>} : vector<16x128xbf16>, vector<128x128xbf16>, vector<16x128xf32> -> vector<16x128xf32>
      %c2 = arith.constant 2 : index
      %29 = memref.load %arg2[%c2] : memref<3xf32, #tpu.memory_space<smem>>
      %30 = vector.broadcast %29 : f32 to vector<16x128xf32>
      %31 = arith.cmpf oge, %28, %30 : vector<16x128xf32>
      %32 = arith.extui %31 : vector<16x128xi1> to vector<16x128xi32>
      %33 = arith.sitofp %32 : vector<16x128xi32> to vector<16x128xf32>
      %c0_18 = arith.constant 0 : index
      %c0_19 = arith.constant 0 : index
      %34 = vector.load %arg7[%c0_18, %c0_19] : memref<16x128xf32, #tpu.memory_space<vmem>>, vector<16x128xf32>
      tpu.vector_store %arg7[%c0_18, %c0_19], %33 {strides = array<i32>} : memref<16x128xf32, #tpu.memory_space<vmem>>, vector<16x128xf32>,
    } else {
    }
    return
  }
  func.func @transform_0(%arg0: i32, %arg1: i32, %arg2: memref<3xf32, #tpu.memory_space<smem>>) -> (i32, i32) {
    %c0_i32 = arith.constant 0 : i32
    return %arg0, %arg1 : i32, i32
  }
  func.func @transform_1(%arg0: i32, %arg1: i32, %arg2: memref<3xf32, #tpu.memory_space<smem>>) -> (i32, i32) {
    %c0_i32 = arith.constant 0 : i32
    %c0_i32_0 = arith.constant 0 : i32
    return %arg1, %c0_i32 : i32, i32
  }
  func.func @transform_2(%arg0: i32, %arg1: i32, %arg2: memref<3xf32, #tpu.memory_space<smem>>) -> (i32, i32) {
    %c0_i32 = arith.constant 0 : i32
    %c0_i32_0 = arith.constant 0 : i32
    %c0_i32_1 = arith.constant 0 : i32
    return %c0_i32, %c0_i32_0 : i32, i32
  }
  func.func @transform_3(%arg0: i32, %arg1: i32, %arg2: memref<3xf32, #tpu.memory_space<smem>>) -> (i32, i32) {
    %c0_i32 = arith.constant 0 : i32
    %c0_i32_0 = arith.constant 0 : i32
    %c0_i32_1 = arith.constant 0 : i32
    return %c0_i32, %c0_i32_0 : i32, i32
  }
  func.func @transform_4(%arg0: i32, %arg1: i32, %arg2: memref<3xf32, #tpu.memory_space<smem>>) -> (i32, i32) {
    %c0_i32 = arith.constant 0 : i32
    %c0_i32_0 = arith.constant 0 : i32
    return %arg0, %c0_i32 : i32, i32
  }
}

</mosaic_0001>

<llo_original>
// kernel: tpu_custom_call.1
$region0: #{tpu_custom_call.1}
  #allocation0 [shape = 'u32[]', space=smem, size = 0x4, offset = 0x4, fixed_abs, tag = 'smem constant byte address 0x4 - core index']
  #allocation1 [shape = 'u32[144,128]{1,0:T(1,128)}', space=vmem, size = 0x12000, scoped, tag = 'internal scratch']
  #allocation2 [shape = 'f32[16,512]{1,0:T(8,128)}', space=vmem, size = 0x8000, scoped, tag = 'scratch operand']
  #allocation3 [shape = 's32[1]{0}', space=sflag, size = 0x4, scoped, tag = 'scoped memory for tpu_custom_call.1']
  #allocation4 [shape = 'u8[512]{0}', space=smem, size = 0x200, scoped, tag = 'prefetched SMEM operand 0']
  %s0 = inlined_call_operand.hbm [shape: f32[3], index: 0, kind: input, shape index: {}]
  %s1 = inlined_call_operand.hbm [shape: bf16[16,512], index: 1, kind: input, shape index: {}]
  %s2 = inlined_call_operand.hbm [shape: bf16[512,512], index: 2, kind: input, shape index: {}]
  %s3 = inlined_call_operand.hbm [shape: bf16[512,128], index: 3, kind: input, shape index: {}]
  %s4 = inlined_call_operand.hbm [shape: bf16[128,128], index: 4, kind: input, shape index: {}]
  %s5 = inlined_call_operand.hbm [shape: f32[16,128], index: 5, kind: output, shape index: {}]
  %s6 = sld [smem:[#allocation0]]
  $region73: #{tpu_custom_call.1} parent=0
    _
  %s8 = ssub.s32 1, %s6
  %s9 = scalar_select 0, %s8, %s6
  %11 = dma.hbm_to_smem %s0, 16, [#allocation4], [#allocation3]
  %12 = dma.done [#allocation3], 16
  %13 = sfence
  $region1: #{tpu_custom_call.1} parent=0
    #allocation5 [shape = 'u8[16384]{0}', space=vmem, size = 0x4000, scoped, tag = 'input window, operand 1']
    #allocation6 [shape = 's32[2]{0}', space=sflag, size = 0x8, scoped, tag = 'scoped memory for tpu_custom_call.1']
    #allocation7 [shape = 's32[2]{0}', space=sflag, size = 0x8, scoped, tag = 'scoped memory for tpu_custom_call.1']
    #allocation8 [shape = 'u8[524288]{0}', space=vmem, size = 0x80000, scoped, tag = 'input window, operand 2']
    #allocation9 [shape = 's32[2]{0}', space=sflag, size = 0x8, scoped, tag = 'scoped memory for tpu_custom_call.1']
    #allocation10 [shape = 'u8[131072]{0}', space=vmem, size = 0x20000, scoped, tag = 'input window, operand 3, single buffered']
    #allocation11 [shape = 'u8[32768]{0}', space=vmem, size = 0x8000, scoped, tag = 'input window, operand 4, single buffered']
    #allocation12 [shape = 's32[1]{0}', space=sflag, size = 0x4, scoped, tag = 'scoped memory for tpu_custom_call.1']
    #allocation13 [shape = 'u8[8192]{0}', space=vmem, size = 0x2000, scoped, tag = 'output window, operand 0, single buffered']
    %14 = vsyncpa [#allocation6], 0
    %s15 = scalar_lea.sflag [#allocation6], 1
    %16 = vsyncpa %s15, 0
    %17 = vsyncpa [#allocation9], 0
    %s18 = scalar_lea.sflag [#allocation9], 1
    %19 = vsyncpa %s18, 0
    %20 = vsyncpa [#allocation12], 0
    %21 = vsyncpa [#allocation7], 0
    loop: start=0, step=1, limit=4
    $region2: #{tpu_custom_call.1} parent=1 // loop_pre_header
      _
    $region3: #{tpu_custom_call.1} parent=1 // loop_header
      %s23 = sphi 0, %s27
      %p24 = scmp.ge.s32.totalorder %s23, 4
      %s30 = sphi 0, %s42
      %s31 = sphi 0, %s38
      %s32 = sphi 0, %s30
      %s33 = sphi 0, %s31
      %s34 = sphi 0, %s32
      %s35 = sphi 0, %s33
      %s47 = sphi 0, %s49
      %s50 = sphi 0, %s47
      %s51 = sphi 0, %s50
      %s67 = sphi 0, %s51
      %s73 = sphi 0, %s75
      %s76 = sphi 0, %s73
      %s77 = sphi 0, %s76
      %s93 = sphi 0, %s77
      %s97 = sphi 0, %s97
      %s99 = sphi 0, %s97
      %s100 = sphi 0, %s99
      %s114 = sphi 0, %s100
      %s118 = sphi 0, %s118
      %s120 = sphi 0, %s118
      %s121 = sphi 0, %s120
      %s135 = sphi 0, %s121
      %s141 = sphi 0, %s143
      %s144 = sphi 0, %s141
      %s145 = sphi 0, %s144
      %s161 = sphi 0, %s145
    $region4: #{tpu_custom_call.1} parent=1 // loop_header_branch
      %26 = sbr.rel (%p24) target = $region8
    $region5: #{tpu_custom_call.1} parent=1 // loop_body
      %s28 = ssub.s32 %s23, 1
      %s29 = ssub.s32 %s23, 2
      %s36 = sadd.s32 1, %s31
      %p37 = scmp.ge.s32.totalorder %s36, 2
      %s38 = scalar_select %p37, 0, %s36
      %s39 = sadd.s32 1, %s30
      %s40 = scalar_select %p37, %s39, %s30
      %p41 = scmp.ge.s32.totalorder %s40, 1
      %s42 = scalar_select %p41, 0, %s40
      %s43 = ssub.s32 %s30, %s42
      %s44 = ssub.s32 %s31, %s38
      %s45 = sor.u32 %s43, %s44
      %p46 = scmp.eq.s32.totalorder %s45, 0
      %s48 = sadd.s32 %s47, 1
      %s49 = scalar_select %p46, %s47, %s48
      %p52 = pneg %p46
      %p53 = scmp.eq.s32.totalorder %s23, 1
      %p54 = por %p52, %p53
      %p55 = scmp.ne.s32.totalorder %s47, %s50
      %p56 = scmp.eq.s32.totalorder %s23, 0
      %p57 = por %p55, %p56
      %p58 = scmp.ne.s32.totalorder %s47, %s50
      %p59 = scmp.eq.s32.totalorder %s28, 1
      %p60 = por %p58, %p59
      %p61 = scmp.ne.s32.totalorder %s50, %s51
      %p62 = scmp.eq.s32.totalorder %s28, 0
      %p63 = por %p61, %p62
      %p64 = scmp.ne.s32.totalorder %s50, %s51
      %p65 = scmp.eq.s32.totalorder %s29, 1
      %p66 = por %p64, %p65
      %p68 = scmp.ne.s32.totalorder %s51, %s67
      %p69 = scmp.eq.s32.totalorder %s29, 0
      %p70 = por %p68, %p69
      %s71 = ssub.s32 %s31, %s38
      %p72 = scmp.eq.s32.totalorder %s71, 0
      %s74 = sadd.s32 %s73, 1
      %s75 = scalar_select %p72, %s73, %s74
      %p78 = pneg %p72
      %p79 = scmp.eq.s32.totalorder %s23, 1
      %p80 = por %p78, %p79
      %p81 = scmp.ne.s32.totalorder %s73, %s76
      %p82 = scmp.eq.s32.totalorder %s23, 0
      %p83 = por %p81, %p82
      %p84 = scmp.ne.s32.totalorder %s73, %s76
      %p85 = scmp.eq.s32.totalorder %s28, 1
      %p86 = por %p84, %p85
      %p87 = scmp.ne.s32.totalorder %s76, %s77
      %p88 = scmp.eq.s32.totalorder %s28, 0
      %p89 = por %p87, %p88
      %p90 = scmp.ne.s32.totalorder %s76, %s77
      %p91 = scmp.eq.s32.totalorder %s29, 1
      %p92 = por %p90, %p91
      %p94 = scmp.ne.s32.totalorder %s77, %s93
      %p95 = scmp.eq.s32.totalorder %s29, 0
      %p96 = por %p94, %p95
      %s98 = sadd.s32 %s97, 1
      %p101 = scmp.eq.s32.totalorder %s23, 1
      %p102 = scmp.ne.s32.totalorder %s97, %s99
      %p103 = scmp.eq.s32.totalorder %s23, 0
      %p104 = por %p102, %p103
      %p105 = scmp.ne.s32.totalorder %s97, %s99
      %p106 = scmp.eq.s32.totalorder %s28, 1
      %p107 = por %p105, %p106
      %p108 = scmp.ne.s32.totalorder %s99, %s100
      %p109 = scmp.eq.s32.totalorder %s28, 0
      %p110 = por %p108, %p109
      %p111 = scmp.ne.s32.totalorder %s99, %s100
      %p112 = scmp.eq.s32.totalorder %s29, 1
      %p113 = por %p111, %p112
      %p115 = scmp.ne.s32.totalorder %s100, %s114
      %p116 = scmp.eq.s32.totalorder %s29, 0
      %p117 = por %p115, %p116
      %s119 = sadd.s32 %s118, 1
      %p122 = scmp.eq.s32.totalorder %s23, 1
      %p123 = scmp.ne.s32.totalorder %s118, %s120
      %p124 = scmp.eq.s32.totalorder %s23, 0
      %p125 = por %p123, %p124
      %p126 = scmp.ne.s32.totalorder %s118, %s120
      %p127 = scmp.eq.s32.totalorder %s28, 1
      %p128 = por %p126, %p127
      %p129 = scmp.ne.s32.totalorder %s120, %s121
      %p130 = scmp.eq.s32.totalorder %s28, 0
      %p131 = por %p129, %p130
      %p132 = scmp.ne.s32.totalorder %s120, %s121
      %p133 = scmp.eq.s32.totalorder %s29, 1
      %p134 = por %p132, %p133
      %p136 = scmp.ne.s32.totalorder %s121, %s135
      %p137 = scmp.eq.s32.totalorder %s29, 0
      %p138 = por %p136, %p137
      %s139 = ssub.s32 %s30, %s42
      %p140 = scmp.eq.s32.totalorder %s139, 0
      %s142 = sadd.s32 %s141, 1
      %s143 = scalar_select %p140, %s141, %s142
      %p146 = pneg %p140
      %p147 = scmp.eq.s32.totalorder %s23, 1
      %p148 = por %p146, %p147
      %p149 = scmp.ne.s32.totalorder %s141, %s144
      %p150 = scmp.eq.s32.totalorder %s23, 0
      %p151 = por %p149, %p150
      %p152 = scmp.ne.s32.totalorder %s141, %s144
      %p153 = scmp.eq.s32.totalorder %s28, 1
      %p154 = por %p152, %p153
      %p155 = scmp.ne.s32.totalorder %s144, %s145
      %p156 = scmp.eq.s32.totalorder %s28, 0
      %p157 = por %p155, %p156
      %p158 = scmp.ne.s32.totalorder %s144, %s145
      %p159 = scmp.eq.s32.totalorder %s29, 1
      %p160 = por %p158, %p159
      %p162 = scmp.ne.s32.totalorder %s145, %s161
      %p163 = scmp.eq.s32.totalorder %s29, 0
      %p164 = por %p162, %p163
      %p165 = scmp.le.s32.totalorder 1, %s23
      %p166 = scmp.lt.s32.totalorder %s23, 3
      %p167 = pnand %p165, %p166
      %p168 = pneg %p167
      // Predicated region
      $region9: #{tpu_custom_call.1} parent=5 // pred_check
        _
      $region10: #{tpu_custom_call.1} parent=5 // pred_check_branch
        %170 = sbr.rel (%p167) target = $region12
      $region11: #{tpu_custom_call.1} parent=5 // pred_region
        %s171 = ssub.s32 %s23, 1
        // Predicated region
        $region13: #{tpu_custom_call.1} parent=11 // pred_check
          %p172 = pneg %p110
        $region14: #{tpu_custom_call.1} parent=11 // pred_check_branch
          %174 = sbr.rel (%p172) target = $region16
        $region15: #{tpu_custom_call.1} parent=11 // pred_region
          %s176 = ssub.s32 4096, 4096
          %177 = vsyncadd [#allocation9], %s176
          %s178 = sshll.u32 [#allocation10], 4
          %s179 = int_to_ptr.vmem [resolvable:$true] %s178
          %184 = dma.hbm_to_vmem [thread:$0]  %s3, 4096, %s179, [#allocation9], 64, 64, 4
        $region16: #{tpu_custom_call.1} parent=11 // pred_fallthru
          _
        // Predicated region
        $region17: #{tpu_custom_call.1} parent=11 // pred_check
          %p185 = pneg %p131
        $region18: #{tpu_custom_call.1} parent=11 // pred_check_branch
          %187 = sbr.rel (%p185) target = $region20
        $region19: #{tpu_custom_call.1} parent=11 // pred_region
          %s189 = ssub.s32 1024, 1024
          %190 = vsyncadd [#allocation12], %s189
          %s191 = sshll.u32 [#allocation11], 4
          %s192 = int_to_ptr.vmem [resolvable:$true] %s191
          %197 = dma.hbm_to_vmem [thread:$0]  %s4, 1024, %s192, [#allocation12], 64, 64, 4
        $region20: #{tpu_custom_call.1} parent=11 // pred_fallthru
          _
      $region12: #{tpu_custom_call.1} parent=5 // pred_fallthru
        _
      %p198 = scmp.lt.s32.totalorder %s23, 2
      // Predicated region
      $region21: #{tpu_custom_call.1} parent=5 // pred_check
        %p199 = pneg %p198
      $region22: #{tpu_custom_call.1} parent=5 // pred_check_branch
        %201 = sbr.rel (%p199) target = $region24
      $region23: #{tpu_custom_call.1} parent=5 // pred_region
        // Predicated region
        $region25: #{tpu_custom_call.1} parent=23 // pred_check
          %p202 = pneg %p57
        $region26: #{tpu_custom_call.1} parent=23 // pred_check_branch
          %204 = sbr.rel (%p202) target = $region28
        $region27: #{tpu_custom_call.1} parent=23 // pred_region
          %s205 = sand.u32 %s47, 1
          %s206 = scalar_lea.sflag [#allocation6], %s205
          %s207 = sand.u32 %s47, 1
          %s208 = smul.addr %s207, 16
          %s209 = scalar_lea.vmem [#allocation5], %s208
          %s210 = smul.u32 2, %s30
          %s211 = smul.u32 2, %s31
          %s213 = ssub.s32 256, 256
          %214 = vsyncadd %s206, %s213
          %s215 = smul.addr %s210, 4
          %s216 = sadd.s32 %s211, %s215
          %s217 = smul.addr %s216, 64
          %s218 = scalar_lea.hbm %s1, %s217
          %s219 = sshll.u32 %s209, 4
          %s220 = int_to_ptr.vmem [resolvable:$true] %s219
          %225 = dma.hbm_to_vmem [thread:$0]  %s218, 256, %s220, %s206, 256, 128, 8
        $region28: #{tpu_custom_call.1} parent=23 // pred_fallthru
          _
        // Predicated region
        $region29: #{tpu_custom_call.1} parent=23 // pred_check
          %p226 = pneg %p83
        $region30: #{tpu_custom_call.1} parent=23 // pred_check_branch
          %228 = sbr.rel (%p226) target = $region32
        $region31: #{tpu_custom_call.1} parent=23 // pred_region
          %s229 = sand.u32 %s23, 1
          %s230 = scalar_lea.sflag [#allocation9], %s229
          %s231 = sand.u32 %s73, 1
          %s232 = smul.addr %s231, 512
          %s233 = scalar_lea.vmem [#allocation8], %s232
          %s234 = smul.u32 32, %s31
          %s236 = ssub.s32 8192, 8192
          %237 = vsyncadd %s230, %s236
          %s238 = smul.addr %s234, 4
          %s239 = smul.addr %s238, 64
          %s240 = scalar_lea.hbm %s2, %s239
          %s241 = sshll.u32 %s233, 4
          %s242 = int_to_ptr.vmem [resolvable:$true] %s241
          %247 = dma.hbm_to_vmem [thread:$0]  %s240, 8192, %s242, %s230, 256, 256, 16
        $region32: #{tpu_custom_call.1} parent=23 // pred_fallthru
          _
      $region24: #{tpu_custom_call.1} parent=5 // pred_fallthru
        _
      %p248 = scmp.le.s32.totalorder 1, %s23
      %p249 = scmp.lt.s32.totalorder %s23, 3
      %p250 = pnand %p248, %p249
      %p251 = pneg %p250
      // Predicated region
      $region33: #{tpu_custom_call.1} parent=5 // pred_check
        _
      $region34: #{tpu_custom_call.1} parent=5 // pred_check_branch
        %253 = sbr.rel (%p250) target = $region36
      $region35: #{tpu_custom_call.1} parent=5 // pred_region
        %s254 = ssub.s32 %s23, 1
        %s255 = sand.u32 %s50, 1
        %s256 = scalar_lea.sflag [#allocation6], %s255
        %s257 = sand.u32 %s50, 1
        %s258 = smul.addr %s257, 16
        %s259 = scalar_lea.vmem [#allocation5], %s258
        // Predicated region
        $region37: #{tpu_custom_call.1} parent=35 // pred_check
          %p260 = pneg %p63
        $region38: #{tpu_custom_call.1} parent=35 // pred_check_branch
          %262 = sbr.rel (%p260) target = $region40
        $region39: #{tpu_custom_call.1} parent=35 // pred_region
          %263 = dma.done %s256, 256
        $region40: #{tpu_custom_call.1} parent=35 // pred_fallthru
          _
        %s264 = sand.u32 %s28, 1
        %s265 = scalar_lea.sflag [#allocation9], %s264
        %s266 = sand.u32 %s76, 1
        %s267 = smul.addr %s266, 512
        %s268 = scalar_lea.vmem [#allocation8], %s267
        // Predicated region
        $region41: #{tpu_custom_call.1} parent=35 // pred_check
          %p269 = pneg %p89
        $region42: #{tpu_custom_call.1} parent=35 // pred_check_branch
          %271 = sbr.rel (%p269) target = $region44
        $region43: #{tpu_custom_call.1} parent=35 // pred_region
          %272 = dma.done %s265, 8192
        $region44: #{tpu_custom_call.1} parent=35 // pred_fallthru
          _
        // Predicated region
        $region45: #{tpu_custom_call.1} parent=35 // pred_check
          %p273 = pneg %p110
        $region46: #{tpu_custom_call.1} parent=35 // pred_check_branch
          %275 = sbr.rel (%p273) target = $region48
        $region47: #{tpu_custom_call.1} parent=35 // pred_region
          %276 = dma.done [#allocation9], 4096
        $region48: #{tpu_custom_call.1} parent=35 // pred_fallthru
          _
        // Predicated region
        $region49: #{tpu_custom_call.1} parent=35 // pred_check
          %p277 = pneg %p131
        $region50: #{tpu_custom_call.1} parent=35 // pred_check_branch
          %279 = sbr.rel (%p277) target = $region52
        $region51: #{tpu_custom_call.1} parent=35 // pred_region
          %280 = dma.done [#allocation12], 1024
        $region52: #{tpu_custom_call.1} parent=35 // pred_fallthru
          _
        %s281 = sand.u32 %s50, 1
        %s282 = scalar_lea.sflag [#allocation6], %s281
        %s283 = sand.u32 %s50, 1
        %s284 = smul.addr %s283, 16
        %s285 = scalar_lea.vmem [#allocation5], %s284
        %p286 = pneg %p63
        %p287 = pneg %p60
        %s288 = sand.u32 %s28, 1
        %s289 = scalar_lea.sflag [#allocation9], %s288
        %s290 = sand.u32 %s76, 1
        %s291 = smul.addr %s290, 512
        %s292 = scalar_lea.vmem [#allocation8], %s291
        %p293 = pneg %p89
        %p294 = pneg %p86
        %p295 = pneg %p110
        %p296 = pneg %p107
        %p297 = pneg %p131
        %p298 = pneg %p128
        %p299 = pneg %p157
        %p300 = pneg %p154
        %s301 = smul.u32 2, %s32
        %s302 = smul.u32 2, %s33
        %s303 = smul.u32 32, %s33
        %s304 = smul.u32 2, %s32
        %p306 = scmp.eq.s32.totalorder %s33, 0
        // Predicated region
        $region53: #{tpu_custom_call.1} parent=35 // pred_check
          %p307 = pneg %p306
        $region54: #{tpu_custom_call.1} parent=35 // pred_check_branch
          %309 = sbr.rel (%p307) target = $region56
        $region55: #{tpu_custom_call.1} parent=35 // pred_region
          %310 = vst [vmem:[#allocation2] sm:$0xff] 0.0
          %311 = vst [vmem:[#allocation2 + $0x8] sm:$0xff] 0.0
          %312 = vst [vmem:[#allocation2 + $0x10] sm:$0xff] 0.0
          %313 = vst [vmem:[#allocation2 + $0x18] sm:$0xff] 0.0
          %314 = vst [vmem:[#allocation2 + $0x20] sm:$0xff] 0.0
          %315 = vst [vmem:[#allocation2 + $0x28] sm:$0xff] 0.0
          %316 = vst [vmem:[#allocation2 + $0x30] sm:$0xff] 0.0
          %317 = vst [vmem:[#allocation2 + $0x38] sm:$0xff] 0.0
        $region56: #{tpu_custom_call.1} parent=35 // pred_fallthru
          _
        %v318 = vld [vmem:[#allocation2] sm:$0xff]
        %v319 = vld [vmem:[#allocation2 + $0x8] sm:$0xff]
        %v320 = vld [vmem:[#allocation2 + $0x10] sm:$0xff]
        %v321 = vld [vmem:[#allocation2 + $0x18] sm:$0xff]
        %v322 = vld [vmem:[#allocation2 + $0x20] sm:$0xff]
        %v323 = vld [vmem:[#allocation2 + $0x28] sm:$0xff]
        %v324 = vld [vmem:[#allocation2 + $0x30] sm:$0xff]
        %v325 = vld [vmem:[#allocation2 + $0x38] sm:$0xff]
        %v326 = vld [vmem:[%s259] sm:$0xff]
        %v327 = vld [vmem:[%s259 + $0x8] sm:$0xff]
        %v328 = vld [vmem:[%s268] sm:$0xff]
        %v329 = vld [vmem:[%s268 + $0x8] sm:$0xff]
        %v330 = vld [vmem:[%s268 + $0x10] sm:$0xff]
        %v331 = vld [vmem:[%s268 + $0x18] sm:$0xff]
        %v332 = vld [vmem:[%s268 + $0x20] sm:$0xff]
        %v333 = vld [vmem:[%s268 + $0x28] sm:$0xff]
        %v334 = vld [vmem:[%s268 + $0x30] sm:$0xff]
        %v335 = vld [vmem:[%s268 + $0x38] sm:$0xff]
        %v336 = vld [vmem:[%s268 + $0x40] sm:$0xff]
        %v337 = vld [vmem:[%s268 + $0x48] sm:$0xff]
        %v338 = vld [vmem:[%s268 + $0x50] sm:$0xff]
        %v339 = vld [vmem:[%s268 + $0x58] sm:$0xff]
        %v340 = vld [vmem:[%s268 + $0x60] sm:$0xff]
        %v341 = vld [vmem:[%s268 + $0x68] sm:$0xff]
        %v342 = vld [vmem:[%s268 + $0x70] sm:$0xff]
        %v343 = vld [vmem:[%s268 + $0x78] sm:$0xff]
        %v344 = vld [vmem:[%s268 + $0x80] sm:$0xff]
        %v345 = vld [vmem:[%s268 + $0x88] sm:$0xff]
        %v346 = vld [vmem:[%s268 + $0x90] sm:$0xff]
        %v347 = vld [vmem:[%s268 + $0x98] sm:$0xff]
        %v348 = vld [vmem:[%s268 + $0xa0] sm:$0xff]
        %v349 = vld [vmem:[%s268 + $0xa8] sm:$0xff]
        %v350 = vld [vmem:[%s268 + $0xb0] sm:$0xff]
        %v351 = vld [vmem:[%s268 + $0xb8] sm:$0xff]
        %v352 = vld [vmem:[%s268 + $0xc0] sm:$0xff]
        %v353 = vld [vmem:[%s268 + $0xc8] sm:$0xff]
        %v354 = vld [vmem:[%s268 + $0xd0] sm:$0xff]
        %v355 = vld [vmem:[%s268 + $0xd8] sm:$0xff]
        %v356 = vld [vmem:[%s268 + $0xe0] sm:$0xff]
        %v357 = vld [vmem:[%s268 + $0xe8] sm:$0xff]
        %v358 = vld [vmem:[%s268 + $0xf0] sm:$0xff]
        %v359 = vld [vmem:[%s268 + $0xf8] sm:$0xff]
        %v360 = vld [vmem:[%s268 + $0x100] sm:$0xff]
        %v361 = vld [vmem:[%s268 + $0x108] sm:$0xff]
        %v362 = vld [vmem:[%s268 + $0x110] sm:$0xff]
        %v363 = vld [vmem:[%s268 + $0x118] sm:$0xff]
        %v364 = vld [vmem:[%s268 + $0x120] sm:$0xff]
        %v365 = vld [vmem:[%s268 + $0x128] sm:$0xff]
        %v366 = vld [vmem:[%s268 + $0x130] sm:$0xff]
        %v367 = vld [vmem:[%s268 + $0x138] sm:$0xff]
        %v368 = vld [vmem:[%s268 + $0x140] sm:$0xff]
        %v369 = vld [vmem:[%s268 + $0x148] sm:$0xff]
        %v370 = vld [vmem:[%s268 + $0x150] sm:$0xff]
        %v371 = vld [vmem:[%s268 + $0x158] sm:$0xff]
        %v372 = vld [vmem:[%s268 + $0x160] sm:$0xff]
        %v373 = vld [vmem:[%s268 + $0x168] sm:$0xff]
        %v374 = vld [vmem:[%s268 + $0x170] sm:$0xff]
        %v375 = vld [vmem:[%s268 + $0x178] sm:$0xff]
        %v376 = vld [vmem:[%s268 + $0x180] sm:$0xff]
        %v377 = vld [vmem:[%s268 + $0x188] sm:$0xff]
        %v378 = vld [vmem:[%s268 + $0x190] sm:$0xff]
        %v379 = vld [vmem:[%s268 + $0x198] sm:$0xff]
        %v380 = vld [vmem:[%s268 + $0x1a0] sm:$0xff]
        %v381 = vld [vmem:[%s268 + $0x1a8] sm:$0xff]
        %v382 = vld [vmem:[%s268 + $0x1b0] sm:$0xff]
        %v383 = vld [vmem:[%s268 + $0x1b8] sm:$0xff]
        %v384 = vld [vmem:[%s268 + $0x1c0] sm:$0xff]
        %v385 = vld [vmem:[%s268 + $0x1c8] sm:$0xff]
        %v386 = vld [vmem:[%s268 + $0x1d0] sm:$0xff]
        %v387 = vld [vmem:[%s268 + $0x1d8] sm:$0xff]
        %v388 = vld [vmem:[%s268 + $0x1e0] sm:$0xff]
        %v389 = vld [vmem:[%s268 + $0x1e8] sm:$0xff]
        %v390 = vld [vmem:[%s268 + $0x1f0] sm:$0xff]
        %v391 = vld [vmem:[%s268 + $0x1f8] sm:$0xff]
        %v394 = vunpack.c.l.b16 %v326
        %v395 = vunpack.c.h.b16 %v326
        %v396 = vunpack.c.l.b16 %v327
        %v397 = vunpack.c.h.b16 %v327
        %v398 = vpack.c.b16 %v396, %v394
        %v399 = vpack.c.b16 %v397, %v395
        %v466 = vunpack.c.l.b16 %v328
        %v467 = vunpack.c.h.b16 %v328
        %v468 = vunpack.c.l.b16 %v329
        %v469 = vunpack.c.h.b16 %v329
        %v470 = vunpack.c.l.b16 %v330
        %v471 = vunpack.c.h.b16 %v330
        %v472 = vunpack.c.l.b16 %v331
        %v473 = vunpack.c.h.b16 %v331
        %v474 = vunpack.c.l.b16 %v332
        %v475 = vunpack.c.h.b16 %v332
        %v476 = vunpack.c.l.b16 %v333
        %v477 = vunpack.c.h.b16 %v333
        %v478 = vunpack.c.l.b16 %v334
        %v479 = vunpack.c.h.b16 %v334
        %v480 = vunpack.c.l.b16 %v335
        %v481 = vunpack.c.h.b16 %v335
        %v482 = vunpack.c.l.b16 %v336
        %v483 = vunpack.c.h.b16 %v336
        %v484 = vunpack.c.l.b16 %v337
        %v485 = vunpack.c.h.b16 %v337
        %v486 = vunpack.c.l.b16 %v338
        %v487 = vunpack.c.h.b16 %v338
        %v488 = vunpack.c.l.b16 %v339
        %v489 = vunpack.c.h.b16 %v339
        %v490 = vunpack.c.l.b16 %v340
        %v491 = vunpack.c.h.b16 %v340
        %v492 = vunpack.c.l.b16 %v341
        %v493 = vunpack.c.h.b16 %v341
        %v494 = vunpack.c.l.b16 %v342
        %v495 = vunpack.c.h.b16 %v342
        %v496 = vunpack.c.l.b16 %v343
        %v497 = vunpack.c.h.b16 %v343
        %v498 = vunpack.c.l.b16 %v344
        %v499 = vunpack.c.h.b16 %v344
        %v500 = vunpack.c.l.b16 %v345
        %v501 = vunpack.c.h.b16 %v345
        %v502 = vunpack.c.l.b16 %v346
        %v503 = vunpack.c.h.b16 %v346
        %v504 = vunpack.c.l.b16 %v347
        %v505 = vunpack.c.h.b16 %v347
        %v506 = vunpack.c.l.b16 %v348
        %v507 = vunpack.c.h.b16 %v348
        %v508 = vunpack.c.l.b16 %v349
        %v509 = vunpack.c.h.b16 %v349
        %v510 = vunpack.c.l.b16 %v350
        %v511 = vunpack.c.h.b16 %v350
        %v512 = vunpack.c.l.b16 %v351
        %v513 = vunpack.c.h.b16 %v351
        %v514 = vunpack.c.l.b16 %v352
        %v515 = vunpack.c.h.b16 %v352
        %v516 = vunpack.c.l.b16 %v353
        %v517 = vunpack.c.h.b16 %v353
        %v518 = vunpack.c.l.b16 %v354
        %v519 = vunpack.c.h.b16 %v354
        %v520 = vunpack.c.l.b16 %v355
        %v521 = vunpack.c.h.b16 %v355
        %v522 = vunpack.c.l.b16 %v356
        %v523 = vunpack.c.h.b16 %v356
        %v524 = vunpack.c.l.b16 %v357
        %v525 = vunpack.c.h.b16 %v357
        %v526 = vunpack.c.l.b16 %v358
        %v527 = vunpack.c.h.b16 %v358
        %v528 = vunpack.c.l.b16 %v359
        %v529 = vunpack.c.h.b16 %v359
        %v530 = vunpack.c.l.b16 %v360
        %v531 = vunpack.c.h.b16 %v360
        %v532 = vunpack.c.l.b16 %v361
        %v533 = vunpack.c.h.b16 %v361
        %v534 = vunpack.c.l.b16 %v362
        %v535 = vunpack.c.h.b16 %v362
        %v536 = vunpack.c.l.b16 %v363
        %v537 = vunpack.c.h.b16 %v363
        %v538 = vunpack.c.l.b16 %v364
        %v539 = vunpack.c.h.b16 %v364
        %v540 = vunpack.c.l.b16 %v365
        %v541 = vunpack.c.h.b16 %v365
        %v542 = vunpack.c.l.b16 %v366
        %v543 = vunpack.c.h.b16 %v366
        %v544 = vunpack.c.l.b16 %v367
        %v545 = vunpack.c.h.b16 %v367
        %v546 = vunpack.c.l.b16 %v368
        %v547 = vunpack.c.h.b16 %v368
        %v548 = vunpack.c.l.b16 %v369
        %v549 = vunpack.c.h.b16 %v369
        %v550 = vunpack.c.l.b16 %v370
        %v551 = vunpack.c.h.b16 %v370
        %v552 = vunpack.c.l.b16 %v371
        %v553 = vunpack.c.h.b16 %v371
        %v554 = vunpack.c.l.b16 %v372
        %v555 = vunpack.c.h.b16 %v372
        %v556 = vunpack.c.l.b16 %v373
        %v557 = vunpack.c.h.b16 %v373
        %v558 = vunpack.c.l.b16 %v374
        %v559 = vunpack.c.h.b16 %v374
        %v560 = vunpack.c.l.b16 %v375
        %v561 = vunpack.c.h.b16 %v375
        %v562 = vunpack.c.l.b16 %v376
        %v563 = vunpack.c.h.b16 %v376
        %v564 = vunpack.c.l.b16 %v377
        %v565 = vunpack.c.h.b16 %v377
        %v566 = vunpack.c.l.b16 %v378
        %v567 = vunpack.c.h.b16 %v378
        %v568 = vunpack.c.l.b16 %v379
        %v569 = vunpack.c.h.b16 %v379
        %v570 = vunpack.c.l.b16 %v380
        %v571 = vunpack.c.h.b16 %v380
        %v572 = vunpack.c.l.b16 %v381
        %v573 = vunpack.c.h.b16 %v381
        %v574 = vunpack.c.l.b16 %v382
        %v575 = vunpack.c.h.b16 %v382
        %v576 = vunpack.c.l.b16 %v383
        %v577 = vunpack.c.h.b16 %v383
        %v578 = vunpack.c.l.b16 %v384
        %v579 = vunpack.c.h.b16 %v384
        %v580 = vunpack.c.l.b16 %v385
        %v581 = vunpack.c.h.b16 %v385
        %v582 = vunpack.c.l.b16 %v386
        %v583 = vunpack.c.h.b16 %v386
        %v584 = vunpack.c.l.b16 %v387
        %v585 = vunpack.c.h.b16 %v387
        %v586 = vunpack.c.l.b16 %v388
        %v587 = vunpack.c.h.b16 %v388
        %v588 = vunpack.c.l.b16 %v389
        %v589 = vunpack.c.h.b16 %v389
        %v590 = vunpack.c.l.b16 %v390
        %v591 = vunpack.c.h.b16 %v390
        %v592 = vunpack.c.l.b16 %v391
        %v593 = vunpack.c.h.b16 %v391
        %v594 = vpack.c.b16 %v470, %v466
        %v595 = vpack.c.b16 %v471, %v467
        %v596 = vpack.c.b16 %v472, %v468
        %v597 = vpack.c.b16 %v473, %v469
        %v598 = vpack.c.b16 %v478, %v474
        %v599 = vpack.c.b16 %v479, %v475
        %v600 = vpack.c.b16 %v480, %v476
        %v601 = vpack.c.b16 %v481, %v477
        %v602 = vpack.c.b16 %v486, %v482
        %v603 = vpack.c.b16 %v487, %v483
        %v604 = vpack.c.b16 %v488, %v484
        %v605 = vpack.c.b16 %v489, %v485
        %v606 = vpack.c.b16 %v494, %v490
        %v607 = vpack.c.b16 %v495, %v491
        %v608 = vpack.c.b16 %v496, %v492
        %v609 = vpack.c.b16 %v497, %v493
        %v610 = vpack.c.b16 %v502, %v498
        %v611 = vpack.c.b16 %v503, %v499
        %v612 = vpack.c.b16 %v504, %v500
        %v613 = vpack.c.b16 %v505, %v501
        %v614 = vpack.c.b16 %v510, %v506
        %v615 = vpack.c.b16 %v511, %v507
        %v616 = vpack.c.b16 %v512, %v508
        %v617 = vpack.c.b16 %v513, %v509
        %v618 = vpack.c.b16 %v518, %v514
        %v619 = vpack.c.b16 %v519, %v515
        %v620 = vpack.c.b16 %v520, %v516
        %v621 = vpack.c.b16 %v521, %v517
        %v622 = vpack.c.b16 %v526, %v522
        %v623 = vpack.c.b16 %v527, %v523
        %v624 = vpack.c.b16 %v528, %v524
        %v625 = vpack.c.b16 %v529, %v525
        %v626 = vpack.c.b16 %v534, %v530
        %v627 = vpack.c.b16 %v535, %v531
        %v628 = vpack.c.b16 %v536, %v532
        %v629 = vpack.c.b16 %v537, %v533
        %v630 = vpack.c.b16 %v542, %v538
        %v631 = vpack.c.b16 %v543, %v539
        %v632 = vpack.c.b16 %v544, %v540
        %v633 = vpack.c.b16 %v545, %v541
        %v634 = vpack.c.b16 %v550, %v546
        %v635 = vpack.c.b16 %v551, %v547
        %v636 = vpack.c.b16 %v552, %v548
        %v637 = vpack.c.b16 %v553, %v549
        %v638 = vpack.c.b16 %v558, %v554
        %v639 = vpack.c.b16 %v559, %v555
        %v640 = vpack.c.b16 %v560, %v556
        %v641 = vpack.c.b16 %v561, %v557
        %v642 = vpack.c.b16 %v566, %v562
        %v643 = vpack.c.b16 %v567, %v563
        %v644 = vpack.c.b16 %v568, %v564
        %v645 = vpack.c.b16 %v569, %v565
        %v646 = vpack.c.b16 %v574, %v570
        %v647 = vpack.c.b16 %v575, %v571
        %v648 = vpack.c.b16 %v576, %v572
        %v649 = vpack.c.b16 %v577, %v573
        %v650 = vpack.c.b16 %v582, %v578
        %v651 = vpack.c.b16 %v583, %v579
        %v652 = vpack.c.b16 %v584, %v580
        %v653 = vpack.c.b16 %v585, %v581
        %v654 = vpack.c.b16 %v590, %v586
        %v655 = vpack.c.b16 %v591, %v587
        %v656 = vpack.c.b16 %v592, %v588
        %v657 = vpack.c.b16 %v593, %v589
        %722 = vmatprep.subr.bf16.mxu0 %v623
        %723 = vmatpush1.bf16.msra.mxu0 %v622
        %724 = vmatprep.subr.bf16.mxu0 %v619
        %725 = vmatpush1.bf16.msra.mxu0 %v618
        %726 = vmatprep.subr.bf16.mxu0 %v615
        %727 = vmatpush1.bf16.msra.mxu0 %v614
        %728 = vmatprep.subr.bf16.mxu0 %v611
        %729 = vmatpush1.bf16.msra.mxu0 %v610
        %730 = vmatprep.subr.bf16.mxu0 %v607
        %731 = vmatpush1.bf16.msra.mxu0 %v606
        %732 = vmatprep.subr.bf16.mxu0 %v603
        %733 = vmatpush1.bf16.msra.mxu0 %v602
        %734 = vmatprep.subr.bf16.mxu0 %v599
        %735 = vmatpush1.bf16.msra.mxu0 %v598
        %736 = vmatprep.subr.bf16.mxu0 %v595
        %737 = vmatpush1.bf16.msra.mxu0 %v594
        %738 = vmatprep.subr.bf16.mxu0 %v655
        %739 = vmatpush2.bf16.msra.mxu0 %v654
        %740 = vmatprep.subr.bf16.mxu0 %v651
        %741 = vmatpush2.bf16.msra.mxu0 %v650
        %742 = vmatprep.subr.bf16.mxu0 %v647
        %743 = vmatpush2.bf16.msra.mxu0 %v646
        %744 = vmatprep.subr.bf16.mxu0 %v643
        %745 = vmatpush2.bf16.msra.mxu0 %v642
        %746 = vmatprep.subr.bf16.mxu0 %v639
        %747 = vmatpush2.bf16.msra.mxu0 %v638
        %748 = vmatprep.subr.bf16.mxu0 %v635
        %749 = vmatpush2.bf16.msra.mxu0 %v634
        %750 = vmatprep.subr.bf16.mxu0 %v631
        %751 = vmatpush2.bf16.msra.mxu0 %v630
        %752 = vmatprep.subr.bf16.mxu0 %v627
        %753 = vmatpush2.bf16.msra.mxu0 %v626
        %754 = vmatprep.mubr.bf16.mxu0 %v399
        %755 = vmatmul.mubr.bf16.gmra.mxu0 %v398
        %v756 = vpop.f32.mrf.mxu0
        %v757 = vadd.f32 0.0, %v756
        %v758 = vpop.f32.mrf.mxu0
        %v759 = vadd.f32 0.0, %v758
        %v760 = vpop.f32.mrf.mxu0
        %v761 = vadd.f32 0.0, %v760
        %v762 = vpop.f32.mrf.mxu0
        %v763 = vadd.f32 0.0, %v762
        %764 = vdwg.mxu0
        %765 = vmatprep.subr.bf16.mxu0 %v625
        %766 = vmatpush1.bf16.msra.mxu0 %v624
        %767 = vmatprep.subr.bf16.mxu0 %v621
        %768 = vmatpush1.bf16.msra.mxu0 %v620
        %769 = vmatprep.subr.bf16.mxu0 %v617
        %770 = vmatpush1.bf16.msra.mxu0 %v616
        %771 = vmatprep.subr.bf16.mxu0 %v613
        %772 = vmatpush1.bf16.msra.mxu0 %v612
        %773 = vmatprep.subr.bf16.mxu0 %v609
        %774 = vmatpush1.bf16.msra.mxu0 %v608
        %775 = vmatprep.subr.bf16.mxu0 %v605
        %776 = vmatpush1.bf16.msra.mxu0 %v604
        %777 = vmatprep.subr.bf16.mxu0 %v601
        %778 = vmatpush1.bf16.msra.mxu0 %v600
        %779 = vmatprep.subr.bf16.mxu0 %v597
        %780 = vmatpush1.bf16.msra.mxu0 %v596
        %781 = vmatprep.subr.bf16.mxu0 %v657
        %782 = vmatpush2.bf16.msra.mxu0 %v656
        %783 = vmatprep.subr.bf16.mxu0 %v653
        %784 = vmatpush2.bf16.msra.mxu0 %v652
        %785 = vmatprep.subr.bf16.mxu0 %v649
        %786 = vmatpush2.bf16.msra.mxu0 %v648
        %787 = vmatprep.subr.bf16.mxu0 %v645
        %788 = vmatpush2.bf16.msra.mxu0 %v644
        %789 = vmatprep.subr.bf16.mxu0 %v641
        %790 = vmatpush2.bf16.msra.mxu0 %v640
        %791 = vmatprep.subr.bf16.mxu0 %v637
        %792 = vmatpush2.bf16.msra.mxu0 %v636
        %793 = vmatprep.subr.bf16.mxu0 %v633
        %794 = vmatpush2.bf16.msra.mxu0 %v632
        %795 = vmatprep.subr.bf16.mxu0 %v629
        %796 = vmatpush2.bf16.msra.mxu0 %v628
        %797 = vmatprep.mubr.bf16.mxu0 %v399
        %798 = vmatmul.mubr.bf16.gmra.mxu0 %v398
        %v799 = vpop.f32.mrf.mxu0
        %v800 = vadd.f32 0.0, %v799
        %v801 = vpop.f32.mrf.mxu0
        %v802 = vadd.f32 0.0, %v801
        %v803 = vpop.f32.mrf.mxu0
        %v804 = vadd.f32 0.0, %v803
        %v805 = vpop.f32.mrf.mxu0
        %v806 = vadd.f32 0.0, %v805
        %807 = vdwg.mxu0
        %v808 = vadd.f32 %v318, %v757
        %v809 = vadd.f32 %v319, %v759
        %v810 = vadd.f32 %v320, %v800
        %v811 = vadd.f32 %v321, %v802
        %v812 = vadd.f32 %v322, %v761
        %v813 = vadd.f32 %v323, %v763
        %v814 = vadd.f32 %v324, %v804
        %v815 = vadd.f32 %v325, %v806
        %816 = vst [vmem:[#allocation2] sm:$0xff] %v808
        %817 = vst [vmem:[#allocation2 + $0x8] sm:$0xff] %v809
        %818 = vst [vmem:[#allocation2 + $0x10] sm:$0xff] %v810
        %819 = vst [vmem:[#allocation2 + $0x18] sm:$0xff] %v811
        %820 = vst [vmem:[#allocation2 + $0x20] sm:$0xff] %v812
        %821 = vst [vmem:[#allocation2 + $0x28] sm:$0xff] %v813
        %822 = vst [vmem:[#allocation2 + $0x30] sm:$0xff] %v814
        %823 = vst [vmem:[#allocation2 + $0x38] sm:$0xff] %v815
        %p824 = scmp.eq.s32.totalorder %s33, 1
        // Predicated region
        $region57: #{tpu_custom_call.1} parent=35 // pred_check
          %p825 = pneg %p824
        $region58: #{tpu_custom_call.1} parent=35 // pred_check_branch
          %827 = sbr.rel (%p825) target = $region60
        $region59: #{tpu_custom_call.1} parent=35 // pred_region
          %v828 = vld [vmem:[#allocation2] sm:$0xff]
          %v829 = vld [vmem:[#allocation2 + $0x8] sm:$0xff]
          %v830 = vld [vmem:[#allocation2 + $0x10] sm:$0xff]
          %v831 = vld [vmem:[#allocation2 + $0x18] sm:$0xff]
          %v832 = vld [vmem:[#allocation2 + $0x20] sm:$0xff]
          %v833 = vld [vmem:[#allocation2 + $0x28] sm:$0xff]
          %v834 = vld [vmem:[#allocation2 + $0x30] sm:$0xff]
          %v835 = vld [vmem:[#allocation2 + $0x38] sm:$0xff]
          %s836 = sld [smem:[#allocation4]]
          %v837 = vstv %s836
          %vm838 = vcmp.ge.f32.partialorder %v828, %v837
          %vm839 = vcmp.ge.f32.partialorder %v829, %v837
          %vm840 = vcmp.ge.f32.partialorder %v830, %v837
          %vm841 = vcmp.ge.f32.partialorder %v831, %v837
          %vm842 = vcmp.ge.f32.partialorder %v832, %v837
          %vm843 = vcmp.ge.f32.partialorder %v833, %v837
          %vm844 = vcmp.ge.f32.partialorder %v834, %v837
          %vm845 = vcmp.ge.f32.partialorder %v835, %v837
          %v846 = vsel %vm838, 1, 0
          %v847 = vsel %vm839, 1, 0
          %v848 = vsel %vm840, 1, 0
          %v849 = vsel %vm841, 1, 0
          %v850 = vsel %vm842, 1, 0
          %v851 = vsel %vm843, 1, 0
          %v852 = vsel %vm844, 1, 0
          %v853 = vsel %vm845, 1, 0
          %v854 = vcvt.s32.f32 %v846
          %v855 = vcvt.s32.f32 %v847
          %v856 = vcvt.s32.f32 %v848
          %v857 = vcvt.s32.f32 %v849
          %v858 = vcvt.s32.f32 %v850
          %v859 = vcvt.s32.f32 %v851
          %v860 = vcvt.s32.f32 %v852
          %v861 = vcvt.s32.f32 %v853
          %v862 = vpack.c.bf16 %v858, %v854
          %v863 = vpack.c.bf16 %v859, %v855
          %v864 = vpack.c.bf16 %v860, %v856
          %v865 = vpack.c.bf16 %v861, %v857
          %v866 = vld [vmem:[#allocation10] sm:$0xf]
          %v867 = vld [vmem:[#allocation10 + $0x4] sm:$0xf]
          %v868 = vld [vmem:[#allocation10 + $0x8] sm:$0xf]
          %v869 = vld [vmem:[#allocation10 + $0xc] sm:$0xf]
          %v870 = vld [vmem:[#allocation10 + $0x10] sm:$0xf]
          %v871 = vld [vmem:[#allocation10 + $0x14] sm:$0xf]
          %v872 = vld [vmem:[#allocation10 + $0x18] sm:$0xf]
          %v873 = vld [vmem:[#allocation10 + $0x1c] sm:$0xf]
          %v874 = vld [vmem:[#allocation10 + $0x20] sm:$0xf]
          %v875 = vld [vmem:[#allocation10 + $0x24] sm:$0xf]
          %v876 = vld [vmem:[#allocation10 + $0x28] sm:$0xf]
          %v877 = vld [vmem:[#allocation10 + $0x2c] sm:$0xf]
          %v878 = vld [vmem:[#allocation10 + $0x30] sm:$0xf]
          %v879 = vld [vmem:[#allocation10 + $0x34] sm:$0xf]
          %v880 = vld [vmem:[#allocation10 + $0x38] sm:$0xf]
          %v881 = vld [vmem:[#allocation10 + $0x3c] sm:$0xf]
          %v882 = vld [vmem:[#allocation10 + $0x40] sm:$0xf]
          %v883 = vld [vmem:[#allocation10 + $0x44] sm:$0xf]
          %v884 = vld [vmem:[#allocation10 + $0x48] sm:$0xf]
          %v885 = vld [vmem:[#allocation10 + $0x4c] sm:$0xf]
          %v886 = vld [vmem:[#allocation10 + $0x50] sm:$0xf]
          %v887 = vld [vmem:[#allocation10 + $0x54] sm:$0xf]
          %v888 = vld [vmem:[#allocation10 + $0x58] sm:$0xf]
          %v889 = vld [vmem:[#allocation10 + $0x5c] sm:$0xf]
          %v890 = vld [vmem:[#allocation10 + $0x60] sm:$0xf]
          %v891 = vld [vmem:[#allocation10 + $0x64] sm:$0xf]
          %v892 = vld [vmem:[#allocation10 + $0x68] sm:$0xf]
          %v893 = vld [vmem:[#allocation10 + $0x6c] sm:$0xf]
          %v894 = vld [vmem:[#allocation10 + $0x70] sm:$0xf]
          %v895 = vld [vmem:[#allocation10 + $0x74] sm:$0xf]
          %v896 = vld [vmem:[#allocation10 + $0x78] sm:$0xf]
          %v897 = vld [vmem:[#allocation10 + $0x7c] sm:$0xf]
          %v898 = vld [vmem:[#allocation10 + $0x80] sm:$0xf]
          %v899 = vld [vmem:[#allocation10 + $0x84] sm:$0xf]
          %v900 = vld [vmem:[#allocation10 + $0x88] sm:$0xf]
          %v901 = vld [vmem:[#allocation10 + $0x8c] sm:$0xf]
          %v902 = vld [vmem:[#allocation10 + $0x90] sm:$0xf]
          %v903 = vld [vmem:[#allocation10 + $0x94] sm:$0xf]
          %v904 = vld [vmem:[#allocation10 + $0x98] sm:$0xf]
          %v905 = vld [vmem:[#allocation10 + $0x9c] sm:$0xf]
          %v906 = vld [vmem:[#allocation10 + $0xa0] sm:$0xf]
          %v907 = vld [vmem:[#allocation10 + $0xa4] sm:$0xf]
          %v908 = vld [vmem:[#allocation10 + $0xa8] sm:$0xf]
          %v909 = vld [vmem:[#allocation10 + $0xac] sm:$0xf]
          %v910 = vld [vmem:[#allocation10 + $0xb0] sm:$0xf]
          %v911 = vld [vmem:[#allocation10 + $0xb4] sm:$0xf]
          %v912 = vld [vmem:[#allocation10 + $0xb8] sm:$0xf]
          %v913 = vld [vmem:[#allocation10 + $0xbc] sm:$0xf]
          %v914 = vld [vmem:[#allocation10 + $0xc0] sm:$0xf]
          %v915 = vld [vmem:[#allocation10 + $0xc4] sm:$0xf]
          %v916 = vld [vmem:[#allocation10 + $0xc8] sm:$0xf]
          %v917 = vld [vmem:[#allocation10 + $0xcc] sm:$0xf]
          %v918 = vld [vmem:[#allocation10 + $0xd0] sm:$0xf]
          %v919 = vld [vmem:[#allocation10 + $0xd4] sm:$0xf]
          %v920 = vld [vmem:[#allocation10 + $0xd8] sm:$0xf]
          %v921 = vld [vmem:[#allocation10 + $0xdc] sm:$0xf]
          %v922 = vld [vmem:[#allocation10 + $0xe0] sm:$0xf]
          %v923 = vld [vmem:[#allocation10 + $0xe4] sm:$0xf]
          %v924 = vld [vmem:[#allocation10 + $0xe8] sm:$0xf]
          %v925 = vld [vmem:[#allocation10 + $0xec] sm:$0xf]
          %v926 = vld [vmem:[#allocation10 + $0xf0] sm:$0xf]
          %v927 = vld [vmem:[#allocation10 + $0xf4] sm:$0xf]
          %v928 = vld [vmem:[#allocation10 + $0xf8] sm:$0xf]
          %v929 = vld [vmem:[#allocation10 + $0xfc] sm:$0xf]
          %v994 = vunpack.c.l.b16 %v866
          %v995 = vunpack.c.l.b16 %v867
          %v996 = vunpack.c.l.b16 %v868
          %v997 = vunpack.c.l.b16 %v869
          %v998 = vunpack.c.l.b16 %v870
          %v999 = vunpack.c.l.b16 %v871
          %v1000 = vunpack.c.l.b16 %v872
          %v1001 = vunpack.c.l.b16 %v873
          %v1002 = vunpack.c.l.b16 %v874
          %v1003 = vunpack.c.l.b16 %v875
          %v1004 = vunpack.c.l.b16 %v876
          %v1005 = vunpack.c.l.b16 %v877
          %v1006 = vunpack.c.l.b16 %v878
          %v1007 = vunpack.c.l.b16 %v879
          %v1008 = vunpack.c.l.b16 %v880
          %v1009 = vunpack.c.l.b16 %v881
          %v1010 = vunpack.c.l.b16 %v882
          %v1011 = vunpack.c.l.b16 %v883
          %v1012 = vunpack.c.l.b16 %v884
          %v1013 = vunpack.c.l.b16 %v885
          %v1014 = vunpack.c.l.b16 %v886
          %v1015 = vunpack.c.l.b16 %v887
          %v1016 = vunpack.c.l.b16 %v888
          %v1017 = vunpack.c.l.b16 %v889
          %v1018 = vunpack.c.l.b16 %v890
          %v1019 = vunpack.c.l.b16 %v891
          %v1020 = vunpack.c.l.b16 %v892
          %v1021 = vunpack.c.l.b16 %v893
          %v1022 = vunpack.c.l.b16 %v894
          %v1023 = vunpack.c.l.b16 %v895
          %v1024 = vunpack.c.l.b16 %v896
          %v1025 = vunpack.c.l.b16 %v897
          %v1026 = vunpack.c.l.b16 %v898
          %v1027 = vunpack.c.l.b16 %v899
          %v1028 = vunpack.c.l.b16 %v900
          %v1029 = vunpack.c.l.b16 %v901
          %v1030 = vunpack.c.l.b16 %v902
          %v1031 = vunpack.c.l.b16 %v903
          %v1032 = vunpack.c.l.b16 %v904
          %v1033 = vunpack.c.l.b16 %v905
          %v1034 = vunpack.c.l.b16 %v906
          %v1035 = vunpack.c.l.b16 %v907
          %v1036 = vunpack.c.l.b16 %v908
          %v1037 = vunpack.c.l.b16 %v909
          %v1038 = vunpack.c.l.b16 %v910
          %v1039 = vunpack.c.l.b16 %v911
          %v1040 = vunpack.c.l.b16 %v912
          %v1041 = vunpack.c.l.b16 %v913
          %v1042 = vunpack.c.l.b16 %v914
          %v1043 = vunpack.c.l.b16 %v915
          %v1044 = vunpack.c.l.b16 %v916
          %v1045 = vunpack.c.l.b16 %v917
          %v1046 = vunpack.c.l.b16 %v918
          %v1047 = vunpack.c.l.b16 %v919
          %v1048 = vunpack.c.l.b16 %v920
          %v1049 = vunpack.c.l.b16 %v921
          %v1050 = vunpack.c.l.b16 %v922
          %v1051 = vunpack.c.l.b16 %v923
          %v1052 = vunpack.c.l.b16 %v924
          %v1053 = vunpack.c.l.b16 %v925
          %v1054 = vunpack.c.l.b16 %v926
          %v1055 = vunpack.c.l.b16 %v927
          %v1056 = vunpack.c.l.b16 %v928
          %v1057 = vunpack.c.l.b16 %v929
          %v1058 = vpack.c.b16 %v995, %v994
          %v1059 = vpack.c.b16 %v997, %v996
          %v1060 = vpack.c.b16 %v999, %v998
          %v1061 = vpack.c.b16 %v1001, %v1000
          %v1062 = vpack.c.b16 %v1003, %v1002
          %v1063 = vpack.c.b16 %v1005, %v1004
          %v1064 = vpack.c.b16 %v1007, %v1006
          %v1065 = vpack.c.b16 %v1009, %v1008
          %v1066 = vpack.c.b16 %v1011, %v1010
          %v1067 = vpack.c.b16 %v1013, %v1012
          %v1068 = vpack.c.b16 %v1015, %v1014
          %v1069 = vpack.c.b16 %v1017, %v1016
          %v1070 = vpack.c.b16 %v1019, %v1018
          %v1071 = vpack.c.b16 %v1021, %v1020
          %v1072 = vpack.c.b16 %v1023, %v1022
          %v1073 = vpack.c.b16 %v1025, %v1024
          %v1074 = vpack.c.b16 %v1027, %v1026
          %v1075 = vpack.c.b16 %v1029, %v1028
          %v1076 = vpack.c.b16 %v1031, %v1030
          %v1077 = vpack.c.b16 %v1033, %v1032
          %v1078 = vpack.c.b16 %v1035, %v1034
          %v1079 = vpack.c.b16 %v1037, %v1036
          %v1080 = vpack.c.b16 %v1039, %v1038
          %v1081 = vpack.c.b16 %v1041, %v1040
          %v1082 = vpack.c.b16 %v1043, %v1042
          %v1083 = vpack.c.b16 %v1045, %v1044
          %v1084 = vpack.c.b16 %v1047, %v1046
          %v1085 = vpack.c.b16 %v1049, %v1048
          %v1086 = vpack.c.b16 %v1051, %v1050
          %v1087 = vpack.c.b16 %v1053, %v1052
          %v1088 = vpack.c.b16 %v1055, %v1054
          %v1089 = vpack.c.b16 %v1057, %v1056
          %1122 = vmatprep.subr.bf16.mxu0 0
          %1123 = vmatpush1.bf16.msra.mxu0 %v1065
          %1124 = vmatprep.subr.bf16.mxu0 0
          %1125 = vmatpush1.bf16.msra.mxu0 %v1064
          %1126 = vmatprep.subr.bf16.mxu0 0
          %1127 = vmatpush1.bf16.msra.mxu0 %v1063
          %1128 = vmatprep.subr.bf16.mxu0 0
          %1129 = vmatpush1.bf16.msra.mxu0 %v1062
          %1130 = vmatprep.subr.bf16.mxu0 0
          %1131 = vmatpush1.bf16.msra.mxu0 %v1061
          %1132 = vmatprep.subr.bf16.mxu0 0
          %1133 = vmatpush1.bf16.msra.mxu0 %v1060
          %1134 = vmatprep.subr.bf16.mxu0 0
          %1135 = vmatpush1.bf16.msra.mxu0 %v1059
          %1136 = vmatprep.subr.bf16.mxu0 0
          %1137 = vmatpush1.bf16.msra.mxu0 %v1058
          %1138 = vmatprep.subr.bf16.mxu0 0
          %1139 = vmatpush2.bf16.msra.mxu0 %v1073
          %1140 = vmatprep.subr.bf16.mxu0 0
          %1141 = vmatpush2.bf16.msra.mxu0 %v1072
          %1142 = vmatprep.subr.bf16.mxu0 0
          %1143 = vmatpush2.bf16.msra.mxu0 %v1071
          %1144 = vmatprep.subr.bf16.mxu0 0
          %1145 = vmatpush2.bf16.msra.mxu0 %v1070
          %1146 = vmatprep.subr.bf16.mxu0 0
          %1147 = vmatpush2.bf16.msra.mxu0 %v1069
          %1148 = vmatprep.subr.bf16.mxu0 0
          %1149 = vmatpush2.bf16.msra.mxu0 %v1068
          %1150 = vmatprep.subr.bf16.mxu0 0
          %1151 = vmatpush2.bf16.msra.mxu0 %v1067
          %1152 = vmatprep.subr.bf16.mxu0 0
          %1153 = vmatpush2.bf16.msra.mxu0 %v1066
          %1154 = vmatprep.mubr.bf16.mxu0 %v863
          %1155 = vmatmul.mubr.bf16.gmra.mxu0 %v862
          %v1156 = vpop.f32.mrf.mxu0
          %v1157 = vadd.f32 0.0, %v1156
          %v1158 = vpop.f32.mrf.mxu0
          %v1159 = vpop.f32.mrf.mxu0
          %v1160 = vadd.f32 0.0, %v1159
          %v1161 = vpop.f32.mrf.mxu0
          %1162 = vdwg.mxu0
          %1163 = vmatprep.subr.bf16.mxu0 0
          %1164 = vmatpush1.bf16.msra.mxu0 %v1081
          %1165 = vmatprep.subr.bf16.mxu0 0
          %1166 = vmatpush1.bf16.msra.mxu0 %v1080
          %1167 = vmatprep.subr.bf16.mxu0 0
          %1168 = vmatpush1.bf16.msra.mxu0 %v1079
          %1169 = vmatprep.subr.bf16.mxu0 0
          %1170 = vmatpush1.bf16.msra.mxu0 %v1078
          %1171 = vmatprep.subr.bf16.mxu0 0
          %1172 = vmatpush1.bf16.msra.mxu0 %v1077
          %1173 = vmatprep.subr.bf16.mxu0 0
          %1174 = vmatpush1.bf16.msra.mxu0 %v1076
          %1175 = vmatprep.subr.bf16.mxu0 0
          %1176 = vmatpush1.bf16.msra.mxu0 %v1075
          %1177 = vmatprep.subr.bf16.mxu0 0
          %1178 = vmatpush1.bf16.msra.mxu0 %v1074
          %1179 = vmatprep.subr.bf16.mxu0 0
          %1180 = vmatpush2.bf16.msra.mxu0 %v1089
          %1181 = vmatprep.subr.bf16.mxu0 0
          %1182 = vmatpush2.bf16.msra.mxu0 %v1088
          %1183 = vmatprep.subr.bf16.mxu0 0
          %1184 = vmatpush2.bf16.msra.mxu0 %v1087
          %1185 = vmatprep.subr.bf16.mxu0 0
          %1186 = vmatpush2.bf16.msra.mxu0 %v1086
          %1187 = vmatprep.subr.bf16.mxu0 0
          %1188 = vmatpush2.bf16.msra.mxu0 %v1085
          %1189 = vmatprep.subr.bf16.mxu0 0
          %1190 = vmatpush2.bf16.msra.mxu0 %v1084
          %1191 = vmatprep.subr.bf16.mxu0 0
          %1192 = vmatpush2.bf16.msra.mxu0 %v1083
          %1193 = vmatprep.subr.bf16.mxu0 0
          %1194 = vmatpush2.bf16.msra.mxu0 %v1082
          %1195 = vmatprep.mubr.bf16.mxu0 %v865
          %1196 = vmatmul.mubr.bf16.gmra.mxu0 %v864
          %v1197 = vpop.f32.mrf.mxu0
          %v1198 = vadd.f32 %v1157, %v1197
          %v1199 = vpop.f32.mrf.mxu0
          %v1200 = vpop.f32.mrf.mxu0
          %v1201 = vadd.f32 %v1160, %v1200
          %v1202 = vpop.f32.mrf.mxu0
          %1203 = vdwg.mxu0
          %s1204 = sld [smem:[#allocation4 + $0x1]]
          %v1205 = vstv %s1204
          %vm1206 = vcmp.ge.f32.partialorder %v1198, %v1205
          %vm1207 = vcmp.ge.f32.partialorder %v1201, %v1205
          %v1208 = vsel %vm1206, 1, 0
          %v1209 = vsel %vm1207, 1, 0
          %v1210 = vcvt.s32.f32 %v1208
          %v1211 = vcvt.s32.f32 %v1209
          %v1212 = vpack.c.bf16 %v1211, %v1210
          %v1213 = vld [vmem:[#allocation11] sm:$0xf]
          %v1214 = vld [vmem:[#allocation11 + $0x4] sm:$0xf]
          %v1215 = vld [vmem:[#allocation11 + $0x8] sm:$0xf]
          %v1216 = vld [vmem:[#allocation11 + $0xc] sm:$0xf]
          %v1217 = vld [vmem:[#allocation11 + $0x10] sm:$0xf]
          %v1218 = vld [vmem:[#allocation11 + $0x14] sm:$0xf]
          %v1219 = vld [vmem:[#allocation11 + $0x18] sm:$0xf]
          %v1220 = vld [vmem:[#allocation11 + $0x1c] sm:$0xf]
          %v1221 = vld [vmem:[#allocation11 + $0x20] sm:$0xf]
          %v1222 = vld [vmem:[#allocation11 + $0x24] sm:$0xf]
          %v1223 = vld [vmem:[#allocation11 + $0x28] sm:$0xf]
          %v1224 = vld [vmem:[#allocation11 + $0x2c] sm:$0xf]
          %v1225 = vld [vmem:[#allocation11 + $0x30] sm:$0xf]
          %v1226 = vld [vmem:[#allocation11 + $0x34] sm:$0xf]
          %v1227 = vld [vmem:[#allocation11 + $0x38] sm:$0xf]
          %v1228 = vld [vmem:[#allocation11 + $0x3c] sm:$0xf]
          %v1245 = vunpack.c.l.b16 %v1213
          %v1246 = vunpack.c.l.b16 %v1214
          %v1247 = vunpack.c.l.b16 %v1215
          %v1248 = vunpack.c.l.b16 %v1216
          %v1249 = vunpack.c.l.b16 %v1217
          %v1250 = vunpack.c.l.b16 %v1218
          %v1251 = vunpack.c.l.b16 %v1219
          %v1252 = vunpack.c.l.b16 %v1220
          %v1253 = vunpack.c.l.b16 %v1221
          %v1254 = vunpack.c.l.b16 %v1222
          %v1255 = vunpack.c.l.b16 %v1223
          %v1256 = vunpack.c.l.b16 %v1224
          %v1257 = vunpack.c.l.b16 %v1225
          %v1258 = vunpack.c.l.b16 %v1226
          %v1259 = vunpack.c.l.b16 %v1227
          %v1260 = vunpack.c.l.b16 %v1228
          %v1261 = vpack.c.b16 %v1246, %v1245
          %v1262 = vpack.c.b16 %v1248, %v1247
          %v1263 = vpack.c.b16 %v1250, %v1249
          %v1264 = vpack.c.b16 %v1252, %v1251
          %v1265 = vpack.c.b16 %v1254, %v1253
          %v1266 = vpack.c.b16 %v1256, %v1255
          %v1267 = vpack.c.b16 %v1258, %v1257
          %v1268 = vpack.c.b16 %v1260, %v1259
          %1277 = vmatprep.subr.bf16.mxu0 0
          %1278 = vmatpush1.bf16.msra.mxu0 %v1268
          %1279 = vmatprep.subr.bf16.mxu0 0
          %1280 = vmatpush1.bf16.msra.mxu0 %v1267
          %1281 = vmatprep.subr.bf16.mxu0 0
          %1282 = vmatpush1.bf16.msra.mxu0 %v1266
          %1283 = vmatprep.subr.bf16.mxu0 0
          %1284 = vmatpush1.bf16.msra.mxu0 %v1265
          %1285 = vmatprep.subr.bf16.mxu0 0
          %1286 = vmatpush1.bf16.msra.mxu0 %v1264
          %1287 = vmatprep.subr.bf16.mxu0 0
          %1288 = vmatpush1.bf16.msra.mxu0 %v1263
          %1289 = vmatprep.subr.bf16.mxu0 0
          %1290 = vmatpush1.bf16.msra.mxu0 %v1262
          %1291 = vmatprep.subr.bf16.mxu0 0
          %1292 = vmatpush1.bf16.msra.mxu0 %v1261
          %1293 = vmatprep.subr.bf16.mxu0 0
          %1294 = vmatpush2.bf16.msra.mxu0 0
          %1295 = vmatprep.subr.bf16.mxu0 0
          %1296 = vmatpush2.bf16.msra.mxu0 0
          %1297 = vmatprep.subr.bf16.mxu0 0
          %1298 = vmatpush2.bf16.msra.mxu0 0
          %1299 = vmatprep.subr.bf16.mxu0 0
          %1300 = vmatpush2.bf16.msra.mxu0 0
          %1301 = vmatprep.subr.bf16.mxu0 0
          %1302 = vmatpush2.bf16.msra.mxu0 0
          %1303 = vmatprep.subr.bf16.mxu0 0
          %1304 = vmatpush2.bf16.msra.mxu0 0
          %1305 = vmatprep.subr.bf16.mxu0 0
          %1306 = vmatpush2.bf16.msra.mxu0 0
          %1307 = vmatprep.subr.bf16.mxu0 0
          %1308 = vmatpush2.bf16.msra.mxu0 0
          %1309 = vmatprep.mubr.bf16.mxu0 0
          %1310 = vmatmul.mubr.bf16.gmra.mxu0 %v1212
          %v1311 = vpop.f32.mrf.mxu0
          %v1312 = vadd.f32 0.0, %v1311
          %v1313 = vpop.f32.mrf.mxu0
          %v1314 = vpop.f32.mrf.mxu0
          %v1315 = vadd.f32 0.0, %v1314
          %v1316 = vpop.f32.mrf.mxu0
          %1317 = vdwg.mxu0
          %s1318 = sld [smem:[#allocation4 + $0x2]]
          %v1319 = vstv %s1318
          %vm1320 = vcmp.ge.f32.partialorder %v1312, %v1319
          %vm1321 = vcmp.ge.f32.partialorder %v1315, %v1319
          %v1322 = vsel %vm1320, 1, 0
          %v1323 = vsel %vm1321, 1, 0
          %v1324 = vcvt.s32.f32 %v1322
          %v1325 = vcvt.s32.f32 %v1323
          %1326 = vst [vmem:[#allocation13] sm:$0xff] %v1324
          %1327 = vst [vmem:[#allocation13 + $0x8] sm:$0xff] %v1325
        $region60: #{tpu_custom_call.1} parent=35 // pred_fallthru
          _
        // Predicated region
        $region61: #{tpu_custom_call.1} parent=35 // pred_check
          %p1328 = pneg %p154
        $region62: #{tpu_custom_call.1} parent=35 // pred_check_branch
          %1330 = sbr.rel (%p1328) target = $region64
        $region63: #{tpu_custom_call.1} parent=35 // pred_region
          %s1331 = smul.u32 2, %s32
          %s1333 = ssub.s32 256, 256
          %1334 = vsyncadd [#allocation7], %s1333
          %s1335 = smul.addr %s1331, 128
          %s1336 = scalar_lea.hbm %s5, %s1335
          %s1337 = sshll.u32 [#allocation13], 4
          %s1338 = int_to_ptr.vmem [resolvable:$true] %s1337
          %1343 = dma.vmem_to_hbm [thread:$0]  %s1338, 256, %s1336, [#allocation7], 128, 128, 8
        $region64: #{tpu_custom_call.1} parent=35 // pred_fallthru
          _
        // Predicated region
        $region65: #{tpu_custom_call.1} parent=35 // pred_check
          %p1344 = pneg %p154
        $region66: #{tpu_custom_call.1} parent=35 // pred_check_branch
          %1346 = sbr.rel (%p1344) target = $region68
        $region67: #{tpu_custom_call.1} parent=35 // pred_region
          %1347 = dma.done [#allocation7], 256
        $region68: #{tpu_custom_call.1} parent=35 // pred_fallthru
          _
      $region36: #{tpu_custom_call.1} parent=5 // pred_fallthru
        _
      %p1348 = scmp.le.s32.totalorder 2, %s23
      // Predicated region
      $region69: #{tpu_custom_call.1} parent=5 // pred_check
        %p1349 = pneg %p1348
      $region70: #{tpu_custom_call.1} parent=5 // pred_check_branch
        %1351 = sbr.rel (%p1349) target = $region72
      $region71: #{tpu_custom_call.1} parent=5 // pred_region
        %s1352 = ssub.s32 %s23, 2
      $region72: #{tpu_custom_call.1} parent=5 // pred_fallthru
        _
    $region6: #{tpu_custom_call.1} parent=1 // loop_footer
      %s27 = sadd.s32 1, %s23
    $region7: #{tpu_custom_call.1} parent=1 // loop_footer_branch
      %22 = sbr.rel target = $region3
    $region8: #{tpu_custom_call.1} parent=1 // loop_exit
      _
    %1353 = vsyncpa [#allocation6], 1
    %s1354 = scalar_lea.sflag [#allocation6], 1
    %1355 = vsyncpa %s1354, 1
    %1356 = vsyncpa [#allocation9], 1
    %s1357 = scalar_lea.sflag [#allocation9], 1
    %1358 = vsyncpa %s1357, 1
    %1359 = vsyncpa [#allocation12], 1
    %1360 = vsyncpa [#allocation7], 1
    %s1361 = scalar_lea.sflag [#allocation7], 1
    %1362 = vsyncpa %s1361, 1

</llo_original>
